<compile_context>
chip_gen: v5e
topology: v5e:2x2
jax: 0.10.0
libtpu: 0.0.40
codegen_flags: <defaults>
</compile_context>

<pallas_src>
import jax
import jax.numpy as jnp
from jax.experimental import pallas as pl
from jax.experimental.pallas import tpu as pltpu


# ----------------------------------------------------------------------------
# Kernel
# ----------------------------------------------------------------------------
def _make_kernel(total_hw, tile_hw):
    """Build the kernel body; total_hw / tile_hw are static Python ints."""
    inv_hw = 1.0 / float(total_hw)
    needs_mask = (total_hw % tile_hw) != 0

    def kernel(x_ref, w1_ref, w2_ref, o_ref, sum_acc, max_acc):
        # x_ref  : (bn, C, tile_hw)  one batch slab x one spatial tile
        # w1_ref : (C, Cr)           first bias-free 1x1 conv
        # w2_ref : (Cr, C)           second bias-free 1x1 conv
        # o_ref  : (bn, C, 1)        sigmoid(MLP(avg) + MLP(max))
        # sum_acc / max_acc : (bn, C) f32 running per-channel partials
        hw = pl.program_id(1)
        last_hw = pl.num_programs(1) - 1

        @pl.when(hw == 0)
        def _init():
            sum_acc[...] = jnp.zeros_like(sum_acc)
            max_acc[...] = jnp.full_like(max_acc, -jnp.inf)

        x = x_ref[...].astype(jnp.float32)                   # (bn, C, tile_hw)
        if needs_mask:
            # Last spatial tile is partial: Pallas pads out-of-range lanes with
            # undefined data, so mask them (0 for sum, -inf for max).
            valid = jnp.minimum(total_hw - hw * tile_hw, tile_hw)
            lane = jax.lax.broadcasted_iota(jnp.int32, x.shape, 2)
            keep = lane < valid
            x_sum = jnp.where(keep, x, 0.0)
            x_max = jnp.where(keep, x, -jnp.inf)
        else:
            x_sum = x
            x_max = x

        # One cross-lane (XLU) reduce per tile, accumulated into tiny (bn, C)
        # scratch with VPU add/max.  The reduce hides under the tile DMA.
        sum_acc[...] += jnp.sum(x_sum, axis=-1)
        max_acc[...] = jnp.maximum(max_acc[...], jnp.max(x_max, axis=-1))

        @pl.when(hw == last_hw)
        def _finalize():
            avg = sum_acc[...] * inv_hw                       # (bn, C)
            mx = max_acc[...]                                 # (bn, C)
            # Stack avg/max rows -> one pair of MXU GEMMs for the shared MLP.
            pooled = jnp.concatenate([avg, mx], axis=0)       # (2*bn, C)
            h = jnp.dot(pooled, w1_ref[...],
                        preferred_element_type=jnp.float32)   # (2*bn, Cr)
            h = jnp.maximum(h, 0.0)                           # ReLU
            y = jnp.dot(h, w2_ref[...],
                        preferred_element_type=jnp.float32)   # (2*bn, C)
            bn = o_ref.shape[0]
            out = jax.nn.sigmoid(y[:bn] + y[bn:])             # (bn, C)
            o_ref[...] = out[:, :, None].astype(o_ref.dtype)

    return kernel


# ----------------------------------------------------------------------------
# Tiling / budgeting helpers
# ----------------------------------------------------------------------------
def _device_params():
    """(x-block budget bytes [total, double-buffered], vmem_limit_bytes, #TCs)."""
    try:
        kind = jax.devices()[0].device_kind.lower()
    except Exception:
        kind = ""
    if "v7" in kind:
        # 64 MiB physical / 32 MiB scoped per TC; 2 TensorCores per chip.
        return 24 << 20, 32 << 20, 2
    if "v6" in kind:
        return 48 << 20, 64 << 20, 1
    if "v5p" in kind or "v4" in kind:
        return 48 << 20, 64 << 20, 2      # megacore generations
    if "v5" in kind:                       # v5e / v5 lite
        return 12 << 20, 16 << 20, 1
    return 12 << 20, 16 << 20, 1           # unknown: conservative defaults


def _pick_bn(n, num_cores):
    """Largest divisor of n that is <= 8 while keeping >= num_cores batch
    grid steps, so the 'parallel' axis can shard across TensorCores."""
    upper = min(n, 8)
    if num_cores > 1:
        upper = min(upper, max(1, n // num_cores))
    for bn in range(upper, 0, -1):
        if n % bn == 0:
            return bn
    return 1


def _pick_tile_hw(hw, bn, c, itemsize, budget_bytes):
    """Spatial tile: whole HW if it fits, otherwise the largest 128-multiple
    such that the double-buffered x blocks stay within budget_bytes."""
    per_block = max(1, budget_bytes // 2)          # 2x for double buffering
    max_tile = per_block // (bn * c * itemsize)
    if hw <= max_tile:
        return hw                                   # single full-extent block
    cap = max(128, (max_tile // 128) * 128)
    # Prefer the largest 128-multiple divisor of hw within the cap (no mask).
    best_div = 0
    t = 128
    while t <= cap:
        if hw % t == 0:
            best_div = t
        t += 128
    return best_div if best_div else cap            # non-divisor -> mask tail


# ----------------------------------------------------------------------------
# Wrapper
# ----------------------------------------------------------------------------
def channel_attention(x, w1, w2, *, stream_dtype=None, xblock_budget_bytes=None):
    """x: (N, C, H, W); w1: (C, C//r); w2: (C//r, C)  ->  (N, C, 1, 1) f32."""
    N, C, H, W = x.shape
    HW = H * W
    Cr = w1.shape[1]

    budget, vmem_limit, num_cores = _device_params()
    if xblock_budget_bytes is not None:
        budget = xblock_budget_bytes

    if stream_dtype is not None:
        x = x.astype(stream_dtype)     # halve HBM traffic; accumulate in f32
    x_flat = x.reshape(N, C, HW)
    itemsize = jnp.dtype(x_flat.dtype).itemsize

    bn = _pick_bn(N, num_cores)
    tile_hw = _pick_tile_hw(HW, bn, C, itemsize, budget)
    grid = (N // bn, pl.cdiv(HW, tile_hw))

    cost = pl.CostEstimate(
        flops=int(8 * N * C * Cr + 2 * N * C * HW),
        transcendentals=int(N * C),
        bytes_accessed=int(N * C * HW * itemsize + (2 * C * Cr + N * C) * 4),
    )

    out = pl.pallas_call(
        _make_kernel(HW, tile_hw),
        out_shape=jax.ShapeDtypeStruct((N, C, 1), jnp.float32),
        grid_spec=pltpu.PrefetchScalarGridSpec(
            num_scalar_prefetch=0,
            grid=grid,
            in_specs=[
                pl.BlockSpec((bn, C, tile_hw), lambda n, h: (n, 0, h)),
                pl.BlockSpec((C, Cr), lambda n, h: (0, 0)),
                pl.BlockSpec((Cr, C), lambda n, h: (0, 0)),
            ],
            out_specs=pl.BlockSpec((bn, C, 1), lambda n, h: (n, 0, 0)),
            scratch_shapes=[
                pltpu.VMEM((bn, C), jnp.float32),   # running sum  (per channel)
                pltpu.VMEM((bn, C), jnp.float32),   # running max  (per channel)
            ],
        ),
        compiler_params=pltpu.CompilerParams(
            dimension_semantics=("parallel", "arbitrary"),
            vmem_limit_bytes=vmem_limit),
        cost_estimate=cost,
    )(x_flat, w1, w2)

    return out.reshape(N, C, 1, 1)


def channel_attention_ref(x, w1, w2):
    """Pure-JAX reference mirroring the PyTorch forward."""
    x = x.astype(jnp.float32)
    avg = jnp.mean(x, axis=(2, 3))                    # (N, C)
    mx = jnp.max(x, axis=(2, 3))                      # (N, C)

    def mlp(v):
        return jnp.maximum(v @ w1, 0.0) @ w2

    return jax.nn.sigmoid(mlp(avg) + mlp(mx))[:, :, None, None]


# ----------------------------------------------------------------------------
# Test
# ----------------------------------------------------------------------------
if __name__ == "__main__":
    # channel=64, ratio=16 -> hidden 4 (channel must be >= ratio in the module).
    N, C, H, W = 2, 64, 16, 16
    ratio = 16
    Cr = C // ratio

    key = jax.random.PRNGKey(0)
    kx, kw1, kw2 = jax.random.split(key, 3)
    x = jax.random.normal(kx, (N, C, H, W), dtype=jnp.float32)
    # Deterministic synthetic weights for the two bias-free 1x1 convs,
    # stored as (C_in, C_out) linear matrices.
    w1 = jax.random.normal(kw1, (C, Cr), dtype=jnp.float32) * 0.1
    w2 = jax.random.normal(kw2, (Cr, C), dtype=jnp.float32) * 0.1

    # 1) Main case (spatial extent fits in one block).
    out = jax.block_until_ready(channel_attention(x, w1, w2))
    ref = channel_attention_ref(x, w1, w2)
    assert out.shape == (N, C, 1, 1)
    assert jnp.allclose(out, ref, atol=1e-5, rtol=1e-5), "f32 mismatch vs reference"

    # 2) Masked tail: HW=320 with a tiny x-block budget forces a 128-multiple
    #    spatial tile that does not divide HW (exercises the in-kernel mask).
    x2 = jax.random.normal(jax.random.PRNGKey(1), (N, C, 16, 20), dtype=jnp.float32)
    out2 = jax.block_until_ready(
        channel_attention(x2, w1, w2, xblock_budget_bytes=128 * 1024))
    ref2 = channel_attention_ref(x2, w1, w2)
    assert jnp.allclose(out2, ref2, atol=1e-5, rtol=1e-5), "masked-tail mismatch"

    # 3) Optional bf16 streaming of x (halves HBM bytes; f32 accumulation).
    out_bf16 = jax.block_until_ready(
        channel_attention(x, w1, w2, stream_dtype=jnp.bfloat16))
    assert jnp.allclose(out_bf16, ref, atol=3e-2, rtol=3e-2), "bf16 mismatch"

    print("KERNEL_OK")
</pallas_src>

<mosaic_0001>
module attributes {stable_mosaic.version = 11 : i64} {
  func.func @kernel(%arg0: i32, %arg1: i32, %arg2: memref<2x64x256xf32, #tpu.memory_space<vmem>>, %arg3: memref<64x4xf32, #tpu.memory_space<vmem>>, %arg4: memref<4x64xf32, #tpu.memory_space<vmem>>, %arg5: memref<2x64x1xf32, #tpu.memory_space<vmem>>, %arg6: memref<2x64xf32, #tpu.memory_space<vmem>>, %arg7: memref<2x64xf32, #tpu.memory_space<vmem>>) attributes {dimension_semantics = [#tpu.dimension_semantics<parallel>, #tpu.dimension_semantics<arbitrary>], iteration_bounds = array<i64: 1, 1>, scalar_prefetch = 0 : i64, scratch_operands = 2 : i64, tpu.core_type = #tpu.core_type<tc>, window_params = [{transform_indices = @transform_0, window_bounds = array<i64: 2, 64, 256>}, {pipeline_mode = #tpu.pipeline_mode<synchronous>, transform_indices = @transform_1, window_bounds = array<i64: 64, 4>}, {pipeline_mode = #tpu.pipeline_mode<synchronous>, transform_indices = @transform_2, window_bounds = array<i64: 4, 64>}, {transform_indices = @transform_3, window_bounds = array<i64: 2, 64, 1>}]} {
    %c0_i32 = arith.constant 0 : i32
    %0 = arith.cmpi eq, %arg1, %c0_i32 : i32
    %1 = arith.extui %0 : i1 to i32
    %c0_i32_0 = arith.constant 0 : i32
    %2 = arith.cmpi ne, %1, %c0_i32_0 : i32
    scf.if %2 {
      %cst_14 = arith.constant 0.000000e+00 : f32
      %15 = vector.broadcast %cst_14 : f32 to vector<2x64xf32>
      %c0_15 = arith.constant 0 : index
      %c0_16 = arith.constant 0 : index
      %16 = vector.load %arg6[%c0_15, %c0_16] : memref<2x64xf32, #tpu.memory_space<vmem>>, vector<2x64xf32>
      tpu.vector_store %arg6[%c0_15, %c0_16], %15 {strides = array<i32>} : memref<2x64xf32, #tpu.memory_space<vmem>>, vector<2x64xf32>,
      %cst_17 = arith.constant 0xFF800000 : f32
      %17 = vector.broadcast %cst_17 : f32 to vector<2x64xf32>
      %c0_18 = arith.constant 0 : index
      %c0_19 = arith.constant 0 : index
      %18 = vector.load %arg7[%c0_18, %c0_19] : memref<2x64xf32, #tpu.memory_space<vmem>>, vector<2x64xf32>
      tpu.vector_store %arg7[%c0_18, %c0_19], %17 {strides = array<i32>} : memref<2x64xf32, #tpu.memory_space<vmem>>, vector<2x64xf32>,
    } else {
    }
    %c0 = arith.constant 0 : index
    %c0_1 = arith.constant 0 : index
    %c0_2 = arith.constant 0 : index
    %3 = vector.load %arg2[%c0, %c0_1, %c0_2] : memref<2x64x256xf32, #tpu.memory_space<vmem>>, vector<2x64x256xf32>
    %c0_3 = arith.constant 0 : index
    %c0_4 = arith.constant 0 : index
    %4 = vector.load %arg6[%c0_3, %c0_4] : memref<2x64xf32, #tpu.memory_space<vmem>>, vector<2x64xf32>
    %cst = arith.constant dense<0.000000e+00> : vector<2x64xf32>
    %5 = vector.multi_reduction <add>, %3, %cst [2] : vector<2x64x256xf32> to vector<2x64xf32>
    %6 = arith.addf %4, %5 : vector<2x64xf32>
    %c0_5 = arith.constant 0 : index
    %c0_6 = arith.constant 0 : index
    %7 = vector.load %arg6[%c0_5, %c0_6] : memref<2x64xf32, #tpu.memory_space<vmem>>, vector<2x64xf32>
    tpu.vector_store %arg6[%c0_5, %c0_6], %6 {strides = array<i32>} : memref<2x64xf32, #tpu.memory_space<vmem>>, vector<2x64xf32>,
    %c0_7 = arith.constant 0 : index
    %c0_8 = arith.constant 0 : index
    %8 = vector.load %arg7[%c0_7, %c0_8] : memref<2x64xf32, #tpu.memory_space<vmem>>, vector<2x64xf32>
    %cst_9 = arith.constant dense<0xFF800000> : vector<2x64xf32>
    %9 = vector.multi_reduction <maximumf>, %3, %cst_9 [2] : vector<2x64x256xf32> to vector<2x64xf32>
    %10 = arith.maximumf %8, %9 : vector<2x64xf32>
    %c0_10 = arith.constant 0 : index
    %c0_11 = arith.constant 0 : index
    %11 = vector.load %arg7[%c0_10, %c0_11] : memref<2x64xf32, #tpu.memory_space<vmem>>, vector<2x64xf32>
    tpu.vector_store %arg7[%c0_10, %c0_11], %10 {strides = array<i32>} : memref<2x64xf32, #tpu.memory_space<vmem>>, vector<2x64xf32>,
    %c0_i32_12 = arith.constant 0 : i32
    %12 = arith.cmpi eq, %arg1, %c0_i32_12 : i32
    %13 = arith.extui %12 : i1 to i32
    %c0_i32_13 = arith.constant 0 : i32
    %14 = arith.cmpi ne, %13, %c0_i32_13 : i32
    scf.if %14 {
      %c0_14 = arith.constant 0 : index
      %c0_15 = arith.constant 0 : index
      %15 = vector.load %arg6[%c0_14, %c0_15] : memref<2x64xf32, #tpu.memory_space<vmem>>, vector<2x64xf32>
      %cst_16 = arith.constant 3.906250e-03 : f32
      %16 = vector.broadcast %cst_16 : f32 to vector<2x64xf32>
      %17 = arith.mulf %15, %16 : vector<2x64xf32>
      %c0_17 = arith.constant 0 : index
      %c0_18 = arith.constant 0 : index
      %18 = vector.load %arg7[%c0_17, %c0_18] : memref<2x64xf32, #tpu.memory_space<vmem>>, vector<2x64xf32>
      %19 = tpu.concatenate %17, %18 in 0 : vector<2x64xf32>, vector<2x64xf32> -> vector<4x64xf32>
      %c0_19 = arith.constant 0 : index
      %c0_20 = arith.constant 0 : index
      %20 = vector.load %arg3[%c0_19, %c0_20] : memref<64x4xf32, #tpu.memory_space<vmem>>, vector<64x4xf32>
      %cst_21 = arith.constant dense<0.000000e+00> : vector<4x4xf32>
      %21 = tpu.matmul %19, %20, %cst_21 {dimension_numbers = #tpu.dot_dimension_numbers<[1], [0], [0], [1], [0, 0, 1, 1], [], []>} : vector<4x64xf32>, vector<64x4xf32>, vector<4x4xf32> -> vector<4x4xf32>
      %cst_22 = arith.constant 0.000000e+00 : f32
      %22 = vector.broadcast %cst_22 : f32 to vector<4x4xf32>
      %23 = arith.maximumf %21, %22 : vector<4x4xf32>
      %c0_23 = arith.constant 0 : index
      %c0_24 = arith.constant 0 : index
      %24 = vector.load %arg4[%c0_23, %c0_24] : memref<4x64xf32, #tpu.memory_space<vmem>>, vector<4x64xf32>
      %cst_25 = arith.constant dense<0.000000e+00> : vector<4x64xf32>
      %25 = tpu.matmul %23, %24, %cst_25 {dimension_numbers = #tpu.dot_dimension_numbers<[1], [0], [0], [1], [0, 0, 1, 1], [], []>} : vector<4x4xf32>, vector<4x64xf32>, vector<4x64xf32> -> vector<4x64xf32>
      %26 = vector.extract_strided_slice %25 {offsets = [0, 0], sizes = [2, 64], strides = [1, 1]} : vector<4x64xf32> to vector<2x64xf32>
      %27 = vector.extract_strided_slice %25 {offsets = [2, 0], sizes = [2, 64], strides = [1, 1]} : vector<4x64xf32> to vector<2x64xf32>
      %28 = arith.addf %26, %27 : vector<2x64xf32>
      %29 = arith.negf %28 : vector<2x64xf32>
      %30 = math.exp %29 : vector<2x64xf32>
      %cst_26 = arith.constant 1.000000e+00 : f32
      %31 = vector.broadcast %cst_26 : f32 to vector<2x64xf32>
      %32 = arith.addf %31, %30 : vector<2x64xf32>
      %33 = arith.divf %31, %32 : vector<2x64xf32>
      %34 = vector.shape_cast %33 : vector<2x64xf32> to vector<2x64x1xf32>
      %c0_27 = arith.constant 0 : index
      %c0_28 = arith.constant 0 : index
      %c0_29 = arith.constant 0 : index
      %35 = vector.load %arg5[%c0_27, %c0_28, %c0_29] : memref<2x64x1xf32, #tpu.memory_space<vmem>>, vector<2x64x1xf32>
      tpu.vector_store %arg5[%c0_27, %c0_28, %c0_29], %34 {strides = array<i32>} : memref<2x64x1xf32, #tpu.memory_space<vmem>>, vector<2x64x1xf32>,
    } else {
    }
    return
  }
  func.func @transform_0(%arg0: i32, %arg1: i32) -> (i32, i32, i32) {
    %c0_i32 = arith.constant 0 : i32
    %c0_i32_0 = arith.constant 0 : i32
    return %arg0, %c0_i32, %arg1 : i32, i32, i32
  }
  func.func @transform_1(%arg0: i32, %arg1: i32) -> (i32, i32) {
    %c0_i32 = arith.constant 0 : i32
    %c0_i32_0 = arith.constant 0 : i32
    %c0_i32_1 = arith.constant 0 : i32
    return %c0_i32, %c0_i32_0 : i32, i32
  }
  func.func @transform_2(%arg0: i32, %arg1: i32) -> (i32, i32) {
    %c0_i32 = arith.constant 0 : i32
    %c0_i32_0 = arith.constant 0 : i32
    %c0_i32_1 = arith.constant 0 : i32
    return %c0_i32, %c0_i32_0 : i32, i32
  }
  func.func @transform_3(%arg0: i32, %arg1: i32) -> (i32, i32, i32) {
    %c0_i32 = arith.constant 0 : i32
    %c0_i32_0 = arith.constant 0 : i32
    %c0_i32_1 = arith.constant 0 : i32
    return %arg0, %c0_i32, %c0_i32_0 : i32, i32, i32
  }
}

</mosaic_0001>

<llo_original>
// kernel: tpu_custom_call.1
$region0: #{tpu_custom_call.1}
  #allocation0 [shape = 'u32[]', space=smem, size = 0x4, offset = 0x4, fixed_abs, tag = 'smem constant byte address 0x4 - core index']
  #allocation1 [shape = 'u32[72,128]{1,0:T(1,128)}', space=vmem, size = 0x9000, scoped, tag = 'internal scratch']
  #allocation2 [shape = 'f32[2,64]{1,0:T(2,128)}', space=vmem, size = 0x400, scoped, tag = 'scratch operand']
  #allocation3 [shape = 'f32[2,64]{1,0:T(2,128)}', space=vmem, size = 0x400, scoped, tag = 'scratch operand']
  %s0 = inlined_call_operand.hbm [shape: f32[2,64,256], index: 0, kind: input, shape index: {}]
  %s1 = inlined_call_operand.vmem [shape: f32[64,4], index: 1, kind: input, shape index: {}]
  %s2 = inlined_call_operand.vmem [shape: f32[4,64], index: 2, kind: input, shape index: {}]
  %s3 = inlined_call_operand.vmem [shape: f32[2,64,1], index: 3, kind: output, shape index: {}]
  %s4 = sld [smem:[#allocation0]]
  $region34: #{tpu_custom_call.1} parent=0
    _
  %s6 = ssub.s32 1, %s4
  %s7 = scalar_select 0, %s6, %s4
  $region1: #{tpu_custom_call.1} parent=0
    #allocation4 [shape = 'u8[131072]{0}', space=vmem, size = 0x20000, scoped, tag = 'input window, operand 0, single buffered']
    #allocation5 [shape = 's32[1]{0}', space=sflag, size = 0x4, scoped, tag = 'scoped memory for tpu_custom_call.1']
    %8 = vsyncpa [#allocation5], 0
    // Predicated region
    $region2: #{tpu_custom_call.1} parent=1 // pred_check
      _
    $region3: #{tpu_custom_call.1} parent=1 // pred_check_branch
      %10 = sbr.rel (0) target = $region5
    $region4: #{tpu_custom_call.1} parent=1 // pred_region
      %12 = vsyncadd [#allocation5], 0
      %s13 = sshll.u32 %s0, 4
      %s14 = int_to_ptr.hbm [resolvable:$true] %s13
      %s15 = sshll.u32 [#allocation4], 4
      %s16 = int_to_ptr.vmem [resolvable:$true] %s15
      %21 = dma.hbm_to_vmem [thread:$0]  %s14, 4096, %s16, [#allocation5], 256, 256, 16
    $region5: #{tpu_custom_call.1} parent=1 // pred_fallthru
      _
    // Predicated region
    $region6: #{tpu_custom_call.1} parent=1 // pred_check
      _
    $region7: #{tpu_custom_call.1} parent=1 // pred_check_branch
      %23 = sbr.rel (0) target = $region9
    $region8: #{tpu_custom_call.1} parent=1 // pred_region
      _
    $region9: #{tpu_custom_call.1} parent=1 // pred_fallthru
      _
    // Predicated region
    $region10: #{tpu_custom_call.1} parent=1 // pred_check
      _
    $region11: #{tpu_custom_call.1} parent=1 // pred_check_branch
      %25 = sbr.rel (0) target = $region13
    $region12: #{tpu_custom_call.1} parent=1 // pred_region
      _
    $region13: #{tpu_custom_call.1} parent=1 // pred_fallthru
      _
    // Predicated region
    $region14: #{tpu_custom_call.1} parent=1 // pred_check
      _
    $region15: #{tpu_custom_call.1} parent=1 // pred_check_branch
      %27 = sbr.rel (0) target = $region17
    $region16: #{tpu_custom_call.1} parent=1 // pred_region
      %29 = dma.done [#allocation5], 4096
    $region17: #{tpu_custom_call.1} parent=1 // pred_fallthru
      _
    %p30 = scmp.eq.s32.totalorder 0, 0
    // Predicated region
    $region18: #{tpu_custom_call.1} parent=1 // pred_check
      %p31 = pneg %p30
    $region19: #{tpu_custom_call.1} parent=1 // pred_check_branch
      %33 = sbr.rel (%p31) target = $region21
    $region20: #{tpu_custom_call.1} parent=1 // pred_region
      %vm34 = vcmask 517120
      %35 = vst.msk [vmem:[#allocation2] sm:$0x3] %vm34, 0.0
      %36 = vst.msk [vmem:[#allocation3] sm:$0x3] %vm34, -inf
    $region21: #{tpu_custom_call.1} parent=1 // pred_fallthru
      _
    %v37 = vld [vmem:[#allocation4] sm:$0xff]
    %v38 = vld [vmem:[#allocation4 + $0x8] sm:$0xff]
    %v39 = vld [vmem:[#allocation4 + $0x10] sm:$0xff]
    %v40 = vld [vmem:[#allocation4 + $0x18] sm:$0xff]
    %v41 = vld [vmem:[#allocation4 + $0x20] sm:$0xff]
    %v42 = vld [vmem:[#allocation4 + $0x28] sm:$0xff]
    %v43 = vld [vmem:[#allocation4 + $0x30] sm:$0xff]
    %v44 = vld [vmem:[#allocation4 + $0x38] sm:$0xff]
    %v45 = vld [vmem:[#allocation4 + $0x40] sm:$0xff]
    %v46 = vld [vmem:[#allocation4 + $0x48] sm:$0xff]
    %v47 = vld [vmem:[#allocation4 + $0x50] sm:$0xff]
    %v48 = vld [vmem:[#allocation4 + $0x58] sm:$0xff]
    %v49 = vld [vmem:[#allocation4 + $0x60] sm:$0xff]
    %v50 = vld [vmem:[#allocation4 + $0x68] sm:$0xff]
    %v51 = vld [vmem:[#allocation4 + $0x70] sm:$0xff]
    %v52 = vld [vmem:[#allocation4 + $0x78] sm:$0xff]
    %v53 = vld [vmem:[#allocation4 + $0x80] sm:$0xff]
    %v54 = vld [vmem:[#allocation4 + $0x88] sm:$0xff]
    %v55 = vld [vmem:[#allocation4 + $0x90] sm:$0xff]
    %v56 = vld [vmem:[#allocation4 + $0x98] sm:$0xff]
    %v57 = vld [vmem:[#allocation4 + $0xa0] sm:$0xff]
    %v58 = vld [vmem:[#allocation4 + $0xa8] sm:$0xff]
    %v59 = vld [vmem:[#allocation4 + $0xb0] sm:$0xff]
    %v60 = vld [vmem:[#allocation4 + $0xb8] sm:$0xff]
    %v61 = vld [vmem:[#allocation4 + $0xc0] sm:$0xff]
    %v62 = vld [vmem:[#allocation4 + $0xc8] sm:$0xff]
    %v63 = vld [vmem:[#allocation4 + $0xd0] sm:$0xff]
    %v64 = vld [vmem:[#allocation4 + $0xd8] sm:$0xff]
    %v65 = vld [vmem:[#allocation4 + $0xe0] sm:$0xff]
    %v66 = vld [vmem:[#allocation4 + $0xe8] sm:$0xff]
    %v67 = vld [vmem:[#allocation4 + $0xf0] sm:$0xff]
    %v68 = vld [vmem:[#allocation4 + $0xf8] sm:$0xff]
    %v69 = vld [vmem:[#allocation2] sm:$0x3]
    %v70 = vadd.f32 %v37, %v38
    %71 = vadd.xlane.f32.xlu0 %v70
    %v72 = vpop.xlane.xlu0 %71
    %v73 = vadd.f32 %v39, %v40
    %74 = vadd.xlane.f32.xlu0 %v73
    %v75 = vpop.xlane.xlu0 %74
    %v76 = vadd.f32 %v41, %v42
    %77 = vadd.xlane.f32.xlu0 %v76
    %v78 = vpop.xlane.xlu0 %77
    %v79 = vadd.f32 %v43, %v44
    %80 = vadd.xlane.f32.xlu0 %v79
    %v81 = vpop.xlane.xlu0 %80
    %v82 = vadd.f32 %v45, %v46
    %83 = vadd.xlane.f32.xlu0 %v82
    %v84 = vpop.xlane.xlu0 %83
    %v85 = vadd.f32 %v47, %v48
    %86 = vadd.xlane.f32.xlu0 %v85
    %v87 = vpop.xlane.xlu0 %86
    %v88 = vadd.f32 %v49, %v50
    %89 = vadd.xlane.f32.xlu0 %v88
    %v90 = vpop.xlane.xlu0 %89
    %v91 = vadd.f32 %v51, %v52
    %92 = vadd.xlane.f32.xlu0 %v91
    %v93 = vpop.xlane.xlu0 %92
    %v94 = vadd.f32 %v53, %v54
    %95 = vadd.xlane.f32.xlu0 %v94
    %v96 = vpop.xlane.xlu0 %95
    %v97 = vadd.f32 %v55, %v56
    %98 = vadd.xlane.f32.xlu0 %v97
    %v99 = vpop.xlane.xlu0 %98
    %v100 = vadd.f32 %v57, %v58
    %101 = vadd.xlane.f32.xlu0 %v100
    %v102 = vpop.xlane.xlu0 %101
    %v103 = vadd.f32 %v59, %v60
    %104 = vadd.xlane.f32.xlu0 %v103
    %v105 = vpop.xlane.xlu0 %104
    %v106 = vadd.f32 %v61, %v62
    %107 = vadd.xlane.f32.xlu0 %v106
    %v108 = vpop.xlane.xlu0 %107
    %v109 = vadd.f32 %v63, %v64
    %110 = vadd.xlane.f32.xlu0 %v109
    %v111 = vpop.xlane.xlu0 %110
    %v112 = vadd.f32 %v65, %v66
    %113 = vadd.xlane.f32.xlu0 %v112
    %v114 = vpop.xlane.xlu0 %113
    %v115 = vadd.f32 %v67, %v68
    %116 = vadd.xlane.f32.xlu0 %v115
    %v117 = vpop.xlane.xlu0 %116
    %v134 = vlaneseq
    %v135 = vand.u32 %v134, 127
    %v136 = vperm.slane %v72, %v135
    %v137 = vadd.s32 %v135, 4294967288
    %v138 = vperm.slane %v75, %v137
    %vm139 = vcmask 130112
    %v140 = vsel %vm139, %v138, %v136
    %v141 = vadd.s32 %v135, 4294967280
    %v142 = vperm.slane %v78, %v141
    %vm143 = vcmask 195712
    %v144 = vsel %vm143, %v142, %v140
    %v145 = vadd.s32 %v135, 4294967272
    %v146 = vperm.slane %v81, %v145
    %vm147 = vcmask 261312
    %v148 = vsel %vm147, %v146, %v144
    %v149 = vadd.s32 %v135, 4294967264
    %v150 = vperm.slane %v84, %v149
    %vm151 = vcmask 326912
    %v152 = vsel %vm151, %v150, %v148
    %v153 = vadd.s32 %v135, 4294967256
    %v154 = vperm.slane %v87, %v153
    %vm155 = vcmask 392512
    %v156 = vsel %vm155, %v154, %v152
    %v157 = vadd.s32 %v135, 4294967248
    %v158 = vperm.slane %v90, %v157
    %vm159 = vcmask 458112
    %v160 = vsel %vm159, %v158, %v156
    %v161 = vadd.s32 %v135, 4294967240
    %v162 = vperm.slane %v93, %v161
    %vm163 = vcmask 523712
    %v164 = vsel %vm163, %v162, %v160
    %v165 = vperm.slane %v96, %v135
    %v166 = vperm.slane %v99, %v137
    %v167 = vsel %vm139, %v166, %v165
    %v168 = vperm.slane %v102, %v141
    %v169 = vsel %vm143, %v168, %v167
    %v170 = vperm.slane %v105, %v145
    %v171 = vsel %vm147, %v170, %v169
    %v172 = vperm.slane %v108, %v149
    %v173 = vsel %vm151, %v172, %v171
    %v174 = vperm.slane %v111, %v153
    %v175 = vsel %vm155, %v174, %v173
    %v176 = vperm.slane %v114, %v157
    %v177 = vsel %vm159, %v176, %v175
    %v178 = vperm.slane %v117, %v161
    %v179 = vsel %vm163, %v178, %v177
    %vm180 = vcmask 1041409
    %v181 = vsel %vm180, %v179, %v164
    %v183 = vadd.f32 %v69, %v181
    %vm184 = vcmask 517120
    %185 = vst.msk [vmem:[#allocation2] sm:$0x3] %vm184, %v183
    %v186 = vld [vmem:[#allocation3] sm:$0x3]
    %v187 = vmax.f32 %v37, %v38
    %188 = vmax.xlane.f32.xlu0 %v187
    %v189 = vpop.xlane.xlu0 %188
    %v190 = vmax.f32 %v39, %v40
    %191 = vmax.xlane.f32.xlu0 %v190
    %v192 = vpop.xlane.xlu0 %191
    %v193 = vmax.f32 %v41, %v42
    %194 = vmax.xlane.f32.xlu0 %v193
    %v195 = vpop.xlane.xlu0 %194
    %v196 = vmax.f32 %v43, %v44
    %197 = vmax.xlane.f32.xlu0 %v196
    %v198 = vpop.xlane.xlu0 %197
    %v199 = vmax.f32 %v45, %v46
    %200 = vmax.xlane.f32.xlu0 %v199
    %v201 = vpop.xlane.xlu0 %200
    %v202 = vmax.f32 %v47, %v48
    %203 = vmax.xlane.f32.xlu0 %v202
    %v204 = vpop.xlane.xlu0 %203
    %v205 = vmax.f32 %v49, %v50
    %206 = vmax.xlane.f32.xlu0 %v205
    %v207 = vpop.xlane.xlu0 %206
    %v208 = vmax.f32 %v51, %v52
    %209 = vmax.xlane.f32.xlu0 %v208
    %v210 = vpop.xlane.xlu0 %209
    %v211 = vmax.f32 %v53, %v54
    %212 = vmax.xlane.f32.xlu0 %v211
    %v213 = vpop.xlane.xlu0 %212
    %v214 = vmax.f32 %v55, %v56
    %215 = vmax.xlane.f32.xlu0 %v214
    %v216 = vpop.xlane.xlu0 %215
    %v217 = vmax.f32 %v57, %v58
    %218 = vmax.xlane.f32.xlu0 %v217
    %v219 = vpop.xlane.xlu0 %218
    %v220 = vmax.f32 %v59, %v60
    %221 = vmax.xlane.f32.xlu0 %v220
    %v222 = vpop.xlane.xlu0 %221
    %v223 = vmax.f32 %v61, %v62
    %224 = vmax.xlane.f32.xlu0 %v223
    %v225 = vpop.xlane.xlu0 %224
    %v226 = vmax.f32 %v63, %v64
    %227 = vmax.xlane.f32.xlu0 %v226
    %v228 = vpop.xlane.xlu0 %227
    %v229 = vmax.f32 %v65, %v66
    %230 = vmax.xlane.f32.xlu0 %v229
    %v231 = vpop.xlane.xlu0 %230
    %v232 = vmax.f32 %v67, %v68
    %233 = vmax.xlane.f32.xlu0 %v232
    %v234 = vpop.xlane.xlu0 %233
    %v251 = vperm.slane %v189, %v135
    %v252 = vperm.slane %v192, %v137
    %v253 = vsel %vm139, %v252, %v251
    %v254 = vperm.slane %v195, %v141
    %v255 = vsel %vm143, %v254, %v253
    %v256 = vperm.slane %v198, %v145
    %v257 = vsel %vm147, %v256, %v255
    %v258 = vperm.slane %v201, %v149
    %v259 = vsel %vm151, %v258, %v257
    %v260 = vperm.slane %v204, %v153
    %v261 = vsel %vm155, %v260, %v259
    %v262 = vperm.slane %v207, %v157
    %v263 = vsel %vm159, %v262, %v261
    %v264 = vperm.slane %v210, %v161
    %v265 = vsel %vm163, %v264, %v263
    %v266 = vperm.slane %v213, %v135
    %v267 = vperm.slane %v216, %v137
    %v268 = vsel %vm139, %v267, %v266
    %v269 = vperm.slane %v219, %v141
    %v270 = vsel %vm143, %v269, %v268
    %v271 = vperm.slane %v222, %v145
    %v272 = vsel %vm147, %v271, %v270
    %v273 = vperm.slane %v225, %v149
    %v274 = vsel %vm151, %v273, %v272
    %v275 = vperm.slane %v228, %v153
    %v276 = vsel %vm155, %v275, %v274
    %v277 = vperm.slane %v231, %v157
    %v278 = vsel %vm159, %v277, %v276
    %v279 = vperm.slane %v234, %v161
    %v280 = vsel %vm163, %v279, %v278
    %v281 = vsel %vm180, %v280, %v265
    %v283 = vmax.f32 %v186, %v281
    %284 = vst.msk [vmem:[#allocation3] sm:$0x3] %vm184, %v283
    // Predicated region
    $region22: #{tpu_custom_call.1} parent=1 // pred_check
      %p285 = pneg %p30
    $region23: #{tpu_custom_call.1} parent=1 // pred_check_branch
      %287 = sbr.rel (%p285) target = $region25
    $region24: #{tpu_custom_call.1} parent=1 // pred_region
      %v288 = vld [vmem:[#allocation2] sm:$0x3]
      %v289 = vmul.f32 %v288, 0.00390625
      %v290 = vld [vmem:[#allocation3] sm:$0x3]
      %v292 = vrot.slane %v290, 6
      %vm294 = vcmask 1041408
      %v295 = vsel %vm294, %v289, %v292
      %v296 = vld [vmem:[%s1] sm:$0xff]
      %v297 = vld [vmem:[%s1 + $0x8] sm:$0xff]
      %v298 = vld [vmem:[%s1 + $0x10] sm:$0xff]
      %v299 = vld [vmem:[%s1 + $0x18] sm:$0xff]
      %v300 = vld [vmem:[%s1 + $0x20] sm:$0xff]
      %v301 = vld [vmem:[%s1 + $0x28] sm:$0xff]
      %v302 = vld [vmem:[%s1 + $0x30] sm:$0xff]
      %v303 = vld [vmem:[%s1 + $0x38] sm:$0xff]
      %vm304 = vcmask 523264
      %v306 = vsel %vm304, %v295, 0
      %308 = vmatpush.msra.mxu0 0.0
      %309 = vmatpush.msra.mxu0 0.0
      %310 = vmatpush.msra.mxu0 0.0
      %311 = vmatpush.msra.mxu0 0.0
      %312 = vmatpush.msra.mxu0 0.0
      %313 = vmatpush.msra.mxu0 0.0
      %314 = vmatpush.msra.mxu0 0.0
      %315 = vmatpush.msra.mxu0 0.0
      %316 = vmatpush.msra.mxu0 %v303
      %317 = vmatpush.msra.mxu0 %v302
      %318 = vmatpush.msra.mxu0 %v301
      %319 = vmatpush.msra.mxu0 %v300
      %320 = vmatpush.msra.mxu0 %v299
      %321 = vmatpush.msra.mxu0 %v298
      %322 = vmatpush.msra.mxu0 %v297
      %323 = vmatpush.msra.mxu0 %v296
      %324 = vmatmul.f32.gmra.mxu0 %v306
      %v325 = vpop.f32.mrf.mxu0
      %v326 = vadd.f32 0.0, %v325
      %327 = vdwg.mxu0
      %v328 = vmax.f32 %v326, 0.0
      %v329 = vld [vmem:[%s2] sm:$0xf]
      %vm330 = vcmask 31744
      %v332 = vsel %vm330, %v328, 0
      %vm334 = vcmask 1043456
      %v336 = vsel %vm334, %v329, 0
      %338 = vmatpush.msra.mxu0 0.0
      %339 = vmatpush.msra.mxu0 0.0
      %340 = vmatpush.msra.mxu0 0.0
      %341 = vmatpush.msra.mxu0 0.0
      %342 = vmatpush.msra.mxu0 0.0
      %343 = vmatpush.msra.mxu0 0.0
      %344 = vmatpush.msra.mxu0 0.0
      %345 = vmatpush.msra.mxu0 0.0
      %346 = vmatpush.msra.mxu0 0.0
      %347 = vmatpush.msra.mxu0 0.0
      %348 = vmatpush.msra.mxu0 0.0
      %349 = vmatpush.msra.mxu0 0.0
      %350 = vmatpush.msra.mxu0 0.0
      %351 = vmatpush.msra.mxu0 0.0
      %352 = vmatpush.msra.mxu0 0.0
      %353 = vmatpush.msra.mxu0 %v336
      %354 = vmatmul.f32.gmra.mxu0 %v332
      %v355 = vpop.f32.mrf.mxu0
      %v356 = vadd.f32 0.0, %v355
      %357 = vdwg.mxu0
      %v359 = vrot.slane %v356, 2
      %v361 = vadd.f32 %v356, %v359
      %v362 = vxor.u32 %v361, 2147483648
      %v363 = vmul.f32 %v362, 1.442695
      %v364 = vpow.pop %v363
      %v365 = vadd.f32 %v364, 1.0
      %v366 = vrcp.pop %v365
      %v367 = vmul.f32 %v365, %v366
      %v368 = vsub.f32 1.0, %v367
      %v369 = vmul.f32 %v366, %v368
      %v370 = vadd.f32 %v366, %v369
      %vm371 = vweird.f32 %v365
      %vm372 = vweird.f32 %v366
      %vm373 = vmor %vm371, %vm372
      %v374 = vsel %vm373, %v366, %v370
      %v375 = vand.u32 2147483647, %v365
      %vm376 = vcmp.eq.f32.partialorder %v375, 8.507059e+37
      %v377 = vand.u32 %v365, 2147483648
      %v378 = vor.u32 1.1754944e-38, %v377
      %v379 = vsel %vm376, %v378, %v374
      %v380 = vmul.f32 1.0, %v379
      %v381 = vperm.slane %v380, 0
      %v382 = vlaneseq
      %v383 = vshrl.u32 %v382, 7
      %385 = vset.pattern.permute.xlu0 %v383
      %386 = vperm.xlu0 %385, %v381
      %v387 = vpop.permute.xlu0 %386
      %v388 = vlaneseq
      %v389 = vshrl.u32 %v388, 7
      %v390 = vadd.s32 %v389, 8
      %391 = vset.pattern.permute.xlu0 %v390
      %392 = vperm.xlu0 %391, %v381
      %v393 = vpop.permute.xlu0 %392
      %v394 = vlaneseq
      %v395 = vshrl.u32 %v394, 7
      %v396 = vadd.s32 %v395, 16
      %397 = vset.pattern.permute.xlu0 %v396
      %398 = vperm.xlu0 %397, %v381
      %v399 = vpop.permute.xlu0 %398
      %v400 = vlaneseq
      %v401 = vshrl.u32 %v400, 7
      %v402 = vadd.s32 %v401, 24
      %403 = vset.pattern.permute.xlu0 %v402
      %404 = vperm.xlu0 %403, %v381
      %v405 = vpop.permute.xlu0 %404
      %v406 = vlaneseq
      %v407 = vshrl.u32 %v406, 7
      %v408 = vadd.s32 %v407, 32
      %409 = vset.pattern.permute.xlu0 %v408
      %410 = vperm.xlu0 %409, %v381
      %v411 = vpop.permute.xlu0 %410
      %v412 = vlaneseq
      %v413 = vshrl.u32 %v412, 7
      %v414 = vadd.s32 %v413, 40
      %415 = vset.pattern.permute.xlu0 %v414
      %416 = vperm.xlu0 %415, %v381
      %v417 = vpop.permute.xlu0 %416
      %v418 = vlaneseq
      %v419 = vshrl.u32 %v418, 7
      %v420 = vadd.s32 %v419, 48
      %421 = vset.pattern.permute.xlu0 %v420
      %422 = vperm.xlu0 %421, %v381
      %v423 = vpop.permute.xlu0 %422
      %v424 = vlaneseq
      %v425 = vshrl.u32 %v424, 7
      %v426 = vadd.s32 %v425, 56
      %427 = vset.pattern.permute.xlu0 %v426
      %428 = vperm.xlu0 %427, %v381
      %v429 = vpop.permute.xlu0 %428
      %v430 = vperm.slane %v380, 1
      %v431 = vlaneseq
      %v432 = vshrl.u32 %v431, 7
      %434 = vset.pattern.permute.xlu0 %v432
      %435 = vperm.xlu0 %434, %v430
      %v436 = vpop.permute.xlu0 %435
      %v437 = vlaneseq
      %v438 = vshrl.u32 %v437, 7
      %v439 = vadd.s32 %v438, 8
      %440 = vset.pattern.permute.xlu0 %v439
      %441 = vperm.xlu0 %440, %v430
      %v442 = vpop.permute.xlu0 %441
      %v443 = vlaneseq
      %v444 = vshrl.u32 %v443, 7
      %v445 = vadd.s32 %v444, 16
      %446 = vset.pattern.permute.xlu0 %v445
      %447 = vperm.xlu0 %446, %v430
      %v448 = vpop.permute.xlu0 %447
      %v449 = vlaneseq
      %v450 = vshrl.u32 %v449, 7
      %v451 = vadd.s32 %v450, 24
      %452 = vset.pattern.permute.xlu0 %v451
      %453 = vperm.xlu0 %452, %v430
      %v454 = vpop.permute.xlu0 %453
      %v455 = vlaneseq
      %v456 = vshrl.u32 %v455, 7
      %v457 = vadd.s32 %v456, 32
      %458 = vset.pattern.permute.xlu0 %v457
      %459 = vperm.xlu0 %458, %v430
      %v460 = vpop.permute.xlu0 %459
      %v461 = vlaneseq
      %v462 = vshrl.u32 %v461, 7
      %v463 = vadd.s32 %v462, 40
      %464 = vset.pattern.permute.xlu0 %v463
      %465 = vperm.xlu0 %464, %v430
      %v466 = vpop.permute.xlu0 %465
      %v467 = vlaneseq
      %v468 = vshrl.u32 %v467, 7
      %v469 = vadd.s32 %v468, 48
      %470 = vset.pattern.permute.xlu0 %v469
      %471 = vperm.xlu0 %470, %v430
      %v472 = vpop.permute.xlu0 %471
      %v473 = vlaneseq
      %v474 = vshrl.u32 %v473, 7
      %v475 = vadd.s32 %v474, 56
      %476 = vset.pattern.permute.xlu0 %v475
      %477 = vperm.xlu0 %476, %v430
      %v478 = vpop.permute.xlu0 %477
      %vm479 = vcmask 7168
      %480 = vst.msk [vmem:[%s3] sm:$0xff] %vm479, %v387
      %481 = vst.msk [vmem:[%s3 + $0x8] sm:$0xff] %vm479, %v393
      %482 = vst.msk [vmem:[%s3 + $0x10] sm:$0xff] %vm479, %v399
      %483 = vst.msk [vmem:[%s3 + $0x18] sm:$0xff] %vm479, %v405
      %484 = vst.msk [vmem:[%s3 + $0x20] sm:$0xff] %vm479, %v411
      %485 = vst.msk [vmem:[%s3 + $0x28] sm:$0xff] %vm479, %v417
      %486 = vst.msk [vmem:[%s3 + $0x30] sm:$0xff] %vm479, %v423
      %487 = vst.msk [vmem:[%s3 + $0x38] sm:$0xff] %vm479, %v429
      %488 = vst.msk [vmem:[%s3 + $0x40] sm:$0xff] %vm479, %v436
      %489 = vst.msk [vmem:[%s3 + $0x48] sm:$0xff] %vm479, %v442
      %490 = vst.msk [vmem:[%s3 + $0x50] sm:$0xff] %vm479, %v448
      %491 = vst.msk [vmem:[%s3 + $0x58] sm:$0xff] %vm479, %v454
      %492 = vst.msk [vmem:[%s3 + $0x60] sm:$0xff] %vm479, %v460
      %493 = vst.msk [vmem:[%s3 + $0x68] sm:$0xff] %vm479, %v466
      %494 = vst.msk [vmem:[%s3 + $0x70] sm:$0xff] %vm479, %v472
      %495 = vst.msk [vmem:[%s3 + $0x78] sm:$0xff] %vm479, %v478
    $region25: #{tpu_custom_call.1} parent=1 // pred_fallthru
      _
    // Predicated region
    $region26: #{tpu_custom_call.1} parent=1 // pred_check
      _
    $region27: #{tpu_custom_call.1} parent=1 // pred_check_branch
      %497 = sbr.rel (0) target = $region29
    $region28: #{tpu_custom_call.1} parent=1 // pred_region
      _
    $region29: #{tpu_custom_call.1} parent=1 // pred_fallthru
      _
    // Predicated region
    $region30: #{tpu_custom_call.1} parent=1 // pred_check
      _
    $region31: #{tpu_custom_call.1} parent=1 // pred_check_branch
      %499 = sbr.rel (0) target = $region33
    $region32: #{tpu_custom_call.1} parent=1 // pred_region
      _
    $region33: #{tpu_custom_call.1} parent=1 // pred_fallthru
      _
    %500 = vsyncpa [#allocation5], 1

</llo_original>
